<compile_context>
chip_gen: v7x
topology: tpu7x:2x2x1
jax: 0.10.0
libtpu: 0.0.40
codegen_flags: <defaults>
</compile_context>

<pallas_src>
import math

import jax
import jax.numpy as jnp
from jax import lax
from jax.experimental import pallas as pl
from jax.experimental.pallas import tpu as pltpu

# ----- problem sizes (small, consistent with the module) -----
BATCH = 2
SEQ = 8
HIDDEN = 32
HEADS = 4
PER_HEAD = HIDDEN // HEADS
DROPOUT = 0.1  # nn.Dropout is the identity at inference time (see kernel)


def _make_kernel(batch, seq, hidden, heads):
    per_head = hidden // heads
    n = batch * seq          # flattened (batch*seq) rows
    lk = heads * n           # score-slab lanes: lane L = head*n + (b_k*seq + j)
    assert seq & (seq - 1) == 0 and n & (n - 1) == 0 and per_head & (per_head - 1) == 0
    s_seq = seq.bit_length() - 1        # row  >> s_seq -> batch index
    s_n = n.bit_length() - 1            # lane >> s_n   -> head index (slab lanes)
    s_ph = per_head.bit_length() - 1    # lane >> s_ph  -> head index (feature lanes)

    def kernel(xqkv_ref, mask_ref, wqkv_ref, wo_ref, ball_ref, out_ref, fw_ref):
        f32 = jnp.float32
        bf16 = jnp.bfloat16

        b_all = ball_ref[...]                          # [1, 4H] f32
        b_qkv = b_all[:, 0:3 * hidden]                 # [1, 3H]
        b_o = b_all[:, 3 * hidden:4 * hidden]          # [1, H]

        # ---- fused Q/K/V projection: ONE bf16 MXU pass, f32 accumulation ----
        qkv = jnp.dot(xqkv_ref[...].astype(bf16), wqkv_ref[...],
                      preferred_element_type=f32) + b_qkv        # [n, 3H]
        q = qkv[:, 0:hidden]
        k = qkv[:, hidden:2 * hidden]
        v = qkv[:, 2 * hidden:3 * hidden]

        # Block-diagonal head mask shared by the K and V expansions:
        # bmask[L, c] = 1 iff head(L) == head(c),  L in [0, heads*n), c in [0, H).
        r_l = lax.broadcasted_iota(jnp.int32, (lk, hidden), 0)
        c_f = lax.broadcasted_iota(jnp.int32, (lk, hidden), 1)
        bmask = ((r_l >> s_n) == (c_f >> s_ph)).astype(f32)      # [lk, H]

        kbd = jnp.tile(k, (heads, 1)) * bmask                    # [lk, H]
        vbd = jnp.tile(v, (heads, 1)) * bmask                    # [lk, H]

        # ---- scores for every (batch, head) pair in ONE matmul --------------
        # scores[row, h*n + kf] = q_head_h(row) . k_head_h(key kf)
        scores = lax.dot_general(
            q.astype(bf16), kbd.astype(bf16),
            dimension_numbers=(((1,), (1,)), ((), ())),
            preferred_element_type=f32)                          # [n, lk]

        # Additive mask: key-padding mask + cross-batch block mask.
        rowi = lax.broadcasted_iota(jnp.int32, (n, lk), 0)
        lani = lax.broadcasted_iota(jnp.int32, (n, lk), 1)
        b_q = rowi >> s_seq
        kflat = lani & (n - 1)
        b_k = kflat >> s_seq
        mask_tiled = jnp.tile(mask_ref[...], (1, heads))         # [1, lk]
        keep = (b_q == b_k).astype(f32) * mask_tiled             # [n, lk]
        scores = scores + (keep - 1.0) * 10000.0

        # One per-row max (constant per row => per-(batch,head) softmax is
        # unchanged); masked lanes underflow exp() to exactly 0.
        scores = scores - jnp.max(scores, axis=-1, keepdims=True)
        e = jnp.exp(scores)                                      # [n, lk]

        # ---- context + softmax denominators in ONE matmul -------------------
        # R = [ v_blockdiag | head-sum matrix ] : slab[:, :H] = unnormalised
        # context (heads concatenated), slab[:, H:] = per-head exp sums.
        r_mat = jnp.concatenate([vbd, bmask], axis=1).astype(bf16)   # [lk, 2H]
        slab = jnp.dot(e.astype(bf16), r_mat,
                       preferred_element_type=f32)                   # [n, 2H]
        ctx = slab[:, 0:hidden] * pl.reciprocal(
            slab[:, hidden:2 * hidden], approx=True)                 # [n, H]
        # TODO(synk): nn.Dropout(probs) is treated as identity (inference mode).

        # ---- output projection: one matmul + one bias add -------------------
        out = jnp.dot(ctx.astype(bf16), wo_ref[...],
                      preferred_element_type=f32) + b_o              # [n, H]
        out_ref[...] = out

        # ---- feature_weights = softmax(out.mean(seq)) for the whole batch ---
        ws = jnp.concatenate(
            [jnp.sum(out[b * seq:(b + 1) * seq, :], axis=0, keepdims=True)
             for b in range(batch)], axis=0) * (1.0 / seq)           # [B, H]
        ws = ws - jnp.max(ws, axis=-1, keepdims=True)
        ew = jnp.exp(ws)
        fw_ref[...] = ew / jnp.sum(ew, axis=-1, keepdims=True)       # exact recip

    return kernel


def pack_params(params):
    """One-time parameter prep:
       * block-diagonal [3H, 3H] QKV weight with the 1/sqrt(per_head) scale
         folded into the Q block, pre-cast to bf16 (MXU-native),
       * bf16 output-projection weight,
       * a single [1, 4H] f32 bias slab (q, k, v, output biases)."""
    wq, bq, wk, bk, wv, bv, wo, bo = params
    h = HIDDEN
    scale = 1.0 / math.sqrt(float(PER_HEAD))
    w_qkv = jnp.zeros((3 * h, 3 * h), jnp.float32)
    w_qkv = w_qkv.at[0:h, 0:h].set(wq * scale)
    w_qkv = w_qkv.at[h:2 * h, h:2 * h].set(wk)
    w_qkv = w_qkv.at[2 * h:3 * h, 2 * h:3 * h].set(wv)
    b_all = jnp.concatenate([bq * scale, bk, bv, bo], axis=1)        # [1, 4H]
    return (w_qkv.astype(jnp.bfloat16), wo.astype(jnp.bfloat16),
            b_all.astype(jnp.float32))


@jax.jit
def multi_headed_attention(key, value, query, mask, packed_params):
    """key/value/query: [B, S, H] f32; mask: [B, S] (1 = attend, 0 = masked).
    packed_params = pack_params(raw_params)."""
    w_qkv, wo_bf, b_all = packed_params
    b, s, h = key.shape
    n = b * s

    # Single [N, 3H] activation so the kernel does one fused QKV matmul
    # (6 KB copy in the wrapper, sanctioned by the perf review).
    x_qkv = jnp.concatenate(
        [query.reshape(n, h), key.reshape(n, h), value.reshape(n, h)], axis=1)
    mask_flat = mask.astype(jnp.float32).reshape(1, n)

    kernel = _make_kernel(b, s, h, HEADS)
    vmem = pl.BlockSpec(memory_space=pltpu.MemorySpace.VMEM)

    out_flat, fw = pl.pallas_call(
        kernel,
        out_shape=(jax.ShapeDtypeStruct((n, h), jnp.float32),
                   jax.ShapeDtypeStruct((b, h), jnp.float32)),
        in_specs=[vmem, vmem, vmem, vmem, vmem],
        out_specs=(vmem, vmem),
    )(x_qkv, mask_flat, w_qkv, wo_bf, b_all)

    return out_flat.reshape(b, s, h), fw


# ---------------- pure-JAX f32 reference (mirrors the PyTorch forward) --------
def reference(key, value, query, mask, params):
    wq, bq, wk, bk, wv, bv, wo, bo = params
    B, S, H = key.shape

    def proj(x, w, b):
        return x @ w + b[None, None, :]

    def split_heads(x):
        return x.reshape(B, S, HEADS, PER_HEAD).transpose(0, 2, 1, 3)

    q = split_heads(proj(query, wq, bq[0]))
    k = split_heads(proj(key, wk, bk[0]))
    v = split_heads(proj(value, wv, bv[0]))

    scores = jnp.einsum('bhqd,bhkd->bhqk', q, k) / math.sqrt(float(PER_HEAD))
    madd = (1.0 - mask.astype(jnp.float32))[:, None, None, :] * (-10000.0)
    scores = scores + madd
    probs = jax.nn.softmax(scores, axis=-1)
    ctx = jnp.einsum('bhqk,bhkd->bhqd', probs, v)
    ctx = ctx.transpose(0, 2, 1, 3).reshape(B, S, H)
    out = ctx @ wo + bo[0][None, None, :]
    fw = jax.nn.softmax(out.mean(axis=1), axis=-1)
    return out, fw


if __name__ == "__main__":
    root = jax.random.PRNGKey(0)
    ks = jax.random.split(root, 12)

    bound = 1.0 / math.sqrt(HIDDEN)

    def lin_params(kw, kb):
        # nn.Linear-style uniform init; weight stored as [in, out].
        w = jax.random.uniform(kw, (HIDDEN, HIDDEN), jnp.float32, -bound, bound)
        b = jax.random.uniform(kb, (1, HIDDEN), jnp.float32, -bound, bound)
        return w, b

    wq, bq = lin_params(ks[0], ks[1])
    wk, bk = lin_params(ks[2], ks[3])
    wv, bv = lin_params(ks[4], ks[5])
    wo, bo = lin_params(ks[6], ks[7])
    raw_params = (wq, bq, wk, bk, wv, bv, wo, bo)

    # One-time parameter prep (outside the per-call hot path).
    packed = pack_params(raw_params)
    jax.block_until_ready(packed)

    key_in = jax.random.normal(ks[8], (BATCH, SEQ, HIDDEN), jnp.float32)
    value_in = jax.random.normal(ks[9], (BATCH, SEQ, HIDDEN), jnp.float32)
    query_in = jax.random.normal(ks[10], (BATCH, SEQ, HIDDEN), jnp.float32)
    # mask: 1 = attend, 0 = masked; mask out the last two positions of batch 1.
    mask_in = jnp.ones((BATCH, SEQ), jnp.float32).at[1, SEQ - 2:].set(0.0)

    out, fw = multi_headed_attention(key_in, value_in, query_in, mask_in, packed)
    jax.block_until_ready((out, fw))

    out_ref, fw_ref = reference(key_in, value_in, query_in, mask_in, raw_params)
    assert out.shape == (BATCH, SEQ, HIDDEN) and fw.shape == (BATCH, HIDDEN)
    # Tolerances account for bf16 MXU operands (f32 accumulation) and the
    # approximate (EUP) reciprocal in the attention softmax.
    assert jnp.allclose(out, out_ref, atol=5e-2, rtol=5e-2), \
        float(jnp.max(jnp.abs(out - out_ref)))
    assert jnp.allclose(fw, fw_ref, atol=5e-3, rtol=5e-2), \
        float(jnp.max(jnp.abs(fw - fw_ref)))

    print("KERNEL_OK")
</pallas_src>

<mosaic_0001>
module attributes {stable_mosaic.version = 11 : i64} {
  func.func @kernel(%arg0: memref<16x96xf32, #tpu.memory_space<vmem>>, %arg1: memref<1x16xf32, #tpu.memory_space<vmem>>, %arg2: memref<96x96xbf16, #tpu.memory_space<vmem>>, %arg3: memref<32x32xbf16, #tpu.memory_space<vmem>>, %arg4: memref<1x128xf32, #tpu.memory_space<vmem>>, %arg5: memref<16x32xf32, #tpu.memory_space<vmem>>, %arg6: memref<2x32xf32, #tpu.memory_space<vmem>>) attributes {dimension_semantics = [], scalar_prefetch = 0 : i64, scratch_operands = 0 : i64, tpu.core_type = #tpu.core_type<tc>} {
    %c0 = arith.constant 0 : index
    %c0_0 = arith.constant 0 : index
    %0 = vector.load %arg4[%c0, %c0_0] : memref<1x128xf32, #tpu.memory_space<vmem>>, vector<1x128xf32>
    %1 = vector.extract_strided_slice %0 {offsets = [0, 0], sizes = [1, 96], strides = [1, 1]} : vector<1x128xf32> to vector<1x96xf32>
    %2 = vector.extract_strided_slice %0 {offsets = [0, 96], sizes = [1, 32], strides = [1, 1]} : vector<1x128xf32> to vector<1x32xf32>
    %c0_1 = arith.constant 0 : index
    %c0_2 = arith.constant 0 : index
    %3 = vector.load %arg0[%c0_1, %c0_2] : memref<16x96xf32, #tpu.memory_space<vmem>>, vector<16x96xf32>
    %4 = arith.truncf %3 : vector<16x96xf32> to vector<16x96xbf16>
    %c0_3 = arith.constant 0 : index
    %c0_4 = arith.constant 0 : index
    %5 = vector.load %arg2[%c0_3, %c0_4] : memref<96x96xbf16, #tpu.memory_space<vmem>>, vector<96x96xbf16>
    %cst = arith.constant dense<0.000000e+00> : vector<16x96xf32>
    %6 = tpu.matmul %4, %5, %cst {dimension_numbers = #tpu.dot_dimension_numbers<[1], [0], [0], [1], [0, 0, 1, 1], [], []>} : vector<16x96xbf16>, vector<96x96xbf16>, vector<16x96xf32> -> vector<16x96xf32>
    %7 = vector.broadcast %1 : vector<1x96xf32> to vector<16x96xf32>
    %8 = arith.addf %6, %7 : vector<16x96xf32>
    %9 = vector.extract_strided_slice %8 {offsets = [0, 0], sizes = [16, 32], strides = [1, 1]} : vector<16x96xf32> to vector<16x32xf32>
    %10 = vector.extract_strided_slice %8 {offsets = [0, 32], sizes = [16, 32], strides = [1, 1]} : vector<16x96xf32> to vector<16x32xf32>
    %11 = vector.extract_strided_slice %8 {offsets = [0, 64], sizes = [16, 32], strides = [1, 1]} : vector<16x96xf32> to vector<16x32xf32>
    %12 = tpu.iota {dimensions = array<i32: 0>} : vector<64x32xi32>
    %13 = tpu.iota {dimensions = array<i32: 1>} : vector<64x32xi32>
    %c4_i32 = arith.constant 4 : i32
    %14 = vector.broadcast %c4_i32 : i32 to vector<64x32xi32>
    %15 = arith.shrsi %12, %14 : vector<64x32xi32>
    %c3_i32 = arith.constant 3 : i32
    %16 = vector.broadcast %c3_i32 : i32 to vector<64x32xi32>
    %17 = arith.shrsi %13, %16 : vector<64x32xi32>
    %18 = arith.cmpi eq, %15, %17 : vector<64x32xi32>
    %19 = arith.extui %18 : vector<64x32xi1> to vector<64x32xi32>
    %20 = arith.sitofp %19 : vector<64x32xi32> to vector<64x32xf32>
    %21 = tpu.concatenate %10, %10, %10, %10 in 0 : vector<16x32xf32>, vector<16x32xf32>, vector<16x32xf32>, vector<16x32xf32> -> vector<64x32xf32>
    %22 = arith.mulf %21, %20 : vector<64x32xf32>
    %23 = tpu.concatenate %11, %11, %11, %11 in 0 : vector<16x32xf32>, vector<16x32xf32>, vector<16x32xf32>, vector<16x32xf32> -> vector<64x32xf32>
    %24 = arith.mulf %23, %20 : vector<64x32xf32>
    %25 = arith.truncf %9 : vector<16x32xf32> to vector<16x32xbf16>
    %26 = arith.truncf %22 : vector<64x32xf32> to vector<64x32xbf16>
    %cst_5 = arith.constant dense<0.000000e+00> : vector<16x64xf32>
    %27 = tpu.matmul %25, %26, %cst_5 {dimension_numbers = #tpu.dot_dimension_numbers<[1], [1], [0], [0], [0, 0, 1, 0], [], []>} : vector<16x32xbf16>, vector<64x32xbf16>, vector<16x64xf32> -> vector<16x64xf32>
    %28 = tpu.iota {dimensions = array<i32: 0>} : vector<16x64xi32>
    %29 = tpu.iota {dimensions = array<i32: 1>} : vector<16x64xi32>
    %c3_i32_6 = arith.constant 3 : i32
    %30 = vector.broadcast %c3_i32_6 : i32 to vector<16x64xi32>
    %31 = arith.shrsi %28, %30 : vector<16x64xi32>
    %c15_i32 = arith.constant 15 : i32
    %32 = vector.broadcast %c15_i32 : i32 to vector<16x64xi32>
    %33 = arith.andi %29, %32 : vector<16x64xi32>
    %c3_i32_7 = arith.constant 3 : i32
    %34 = vector.broadcast %c3_i32_7 : i32 to vector<16x64xi32>
    %35 = arith.shrsi %33, %34 : vector<16x64xi32>
    %c0_8 = arith.constant 0 : index
    %c0_9 = arith.constant 0 : index
    %36 = vector.load %arg1[%c0_8, %c0_9] : memref<1x16xf32, #tpu.memory_space<vmem>>, vector<1x16xf32>
    %37 = tpu.concatenate %36, %36, %36, %36 in 1 : vector<1x16xf32>, vector<1x16xf32>, vector<1x16xf32>, vector<1x16xf32> -> vector<1x64xf32>
    %38 = arith.cmpi eq, %31, %35 : vector<16x64xi32>
    %39 = arith.extui %38 : vector<16x64xi1> to vector<16x64xi32>
    %40 = arith.sitofp %39 : vector<16x64xi32> to vector<16x64xf32>
    %41 = vector.broadcast %37 : vector<1x64xf32> to vector<16x64xf32>
    %42 = arith.mulf %40, %41 : vector<16x64xf32>
    %cst_10 = arith.constant 1.000000e+00 : f32
    %43 = vector.broadcast %cst_10 : f32 to vector<16x64xf32>
    %44 = arith.subf %42, %43 : vector<16x64xf32>
    %cst_11 = arith.constant 1.000000e+04 : f32
    %45 = vector.broadcast %cst_11 : f32 to vector<16x64xf32>
    %46 = arith.mulf %44, %45 : vector<16x64xf32>
    %47 = arith.addf %27, %46 : vector<16x64xf32>
    %cst_12 = arith.constant dense<0xFF800000> : vector<16xf32>
    %48 = vector.multi_reduction <maximumf>, %47, %cst_12 [1] : vector<16x64xf32> to vector<16xf32>
    %49 = vector.shape_cast %48 : vector<16xf32> to vector<16x1xf32>
    %50 = vector.broadcast %49 : vector<16x1xf32> to vector<16x64xf32>
    %51 = arith.subf %47, %50 : vector<16x64xf32>
    %52 = math.exp %51 : vector<16x64xf32>
    %53 = tpu.concatenate %24, %20 in 1 : vector<64x32xf32>, vector<64x32xf32> -> vector<64x64xf32>
    %54 = arith.truncf %53 : vector<64x64xf32> to vector<64x64xbf16>
    %55 = arith.truncf %52 : vector<16x64xf32> to vector<16x64xbf16>
    %cst_13 = arith.constant dense<0.000000e+00> : vector<16x64xf32>
    %56 = tpu.matmul %55, %54, %cst_13 {dimension_numbers = #tpu.dot_dimension_numbers<[1], [0], [0], [1], [0, 0, 1, 1], [], []>} : vector<16x64xbf16>, vector<64x64xbf16>, vector<16x64xf32> -> vector<16x64xf32>
    %57 = vector.extract_strided_slice %56 {offsets = [0, 0], sizes = [16, 32], strides = [1, 1]} : vector<16x64xf32> to vector<16x32xf32>
    %58 = vector.extract_strided_slice %56 {offsets = [0, 32], sizes = [16, 32], strides = [1, 1]} : vector<16x64xf32> to vector<16x32xf32>
    %59 = tpu.reciprocal %58 {approx = true} : vector<16x32xf32> -> vector<16x32xf32>
    %60 = arith.mulf %57, %59 : vector<16x32xf32>
    %61 = arith.truncf %60 : vector<16x32xf32> to vector<16x32xbf16>
    %c0_14 = arith.constant 0 : index
    %c0_15 = arith.constant 0 : index
    %62 = vector.load %arg3[%c0_14, %c0_15] : memref<32x32xbf16, #tpu.memory_space<vmem>>, vector<32x32xbf16>
    %cst_16 = arith.constant dense<0.000000e+00> : vector<16x32xf32>
    %63 = tpu.matmul %61, %62, %cst_16 {dimension_numbers = #tpu.dot_dimension_numbers<[1], [0], [0], [1], [0, 0, 1, 1], [], []>} : vector<16x32xbf16>, vector<32x32xbf16>, vector<16x32xf32> -> vector<16x32xf32>
    %64 = vector.broadcast %2 : vector<1x32xf32> to vector<16x32xf32>
    %65 = arith.addf %63, %64 : vector<16x32xf32>
    %c0_17 = arith.constant 0 : index
    %c0_18 = arith.constant 0 : index
    %66 = vector.load %arg5[%c0_17, %c0_18] : memref<16x32xf32, #tpu.memory_space<vmem>>, vector<16x32xf32>
    tpu.vector_store %arg5[%c0_17, %c0_18], %65 {strides = array<i32>} : memref<16x32xf32, #tpu.memory_space<vmem>>, vector<16x32xf32>,
    %67 = vector.extract_strided_slice %65 {offsets = [0, 0], sizes = [8, 32], strides = [1, 1]} : vector<16x32xf32> to vector<8x32xf32>
    %cst_19 = arith.constant dense<0.000000e+00> : vector<32xf32>
    %68 = vector.multi_reduction <add>, %67, %cst_19 [0] : vector<8x32xf32> to vector<32xf32>
    %69 = vector.shape_cast %68 : vector<32xf32> to vector<1x32xf32>
    %70 = vector.extract_strided_slice %65 {offsets = [8, 0], sizes = [8, 32], strides = [1, 1]} : vector<16x32xf32> to vector<8x32xf32>
    %cst_20 = arith.constant dense<0.000000e+00> : vector<32xf32>
    %71 = vector.multi_reduction <add>, %70, %cst_20 [0] : vector<8x32xf32> to vector<32xf32>
    %72 = vector.shape_cast %71 : vector<32xf32> to vector<1x32xf32>
    %73 = tpu.concatenate %69, %72 in 0 : vector<1x32xf32>, vector<1x32xf32> -> vector<2x32xf32>
    %cst_21 = arith.constant 1.250000e-01 : f32
    %74 = vector.broadcast %cst_21 : f32 to vector<2x32xf32>
    %75 = arith.mulf %73, %74 : vector<2x32xf32>
    %cst_22 = arith.constant dense<0xFF800000> : vector<2xf32>
    %76 = vector.multi_reduction <maximumf>, %75, %cst_22 [1] : vector<2x32xf32> to vector<2xf32>
    %77 = vector.shape_cast %76 : vector<2xf32> to vector<2x1xf32>
    %78 = vector.broadcast %77 : vector<2x1xf32> to vector<2x32xf32>
    %79 = arith.subf %75, %78 : vector<2x32xf32>
    %80 = math.exp %79 : vector<2x32xf32>
    %cst_23 = arith.constant dense<0.000000e+00> : vector<2xf32>
    %81 = vector.multi_reduction <add>, %80, %cst_23 [1] : vector<2x32xf32> to vector<2xf32>
    %82 = vector.shape_cast %81 : vector<2xf32> to vector<2x1xf32>
    %83 = vector.broadcast %82 : vector<2x1xf32> to vector<2x32xf32>
    %84 = arith.divf %80, %83 : vector<2x32xf32>
    %c0_24 = arith.constant 0 : index
    %c0_25 = arith.constant 0 : index
    %85 = vector.load %arg6[%c0_24, %c0_25] : memref<2x32xf32, #tpu.memory_space<vmem>>, vector<2x32xf32>
    tpu.vector_store %arg6[%c0_24, %c0_25], %84 {strides = array<i32>} : memref<2x32xf32, #tpu.memory_space<vmem>>, vector<2x32xf32>,
    return
  }
}

</mosaic_0001>

<llo_original>
// kernel: multi_headed_attention.1
$region0: #{multi_headed_attention.1}
  #allocation0 [shape = 'u32[]', space=smem, size = 0x4, offset = 0x4, fixed_abs, tag = 'smem constant byte address 0x4 - core index']
  #allocation1 [shape = 'u32[144,128]{1,0:T(1,128)}', space=vmem, size = 0x12000, scoped, tag = 'internal scratch']
  %s0 = inlined_call_operand.vmem [shape: f32[16,96], index: 0, kind: input, shape index: {}]
  %s1 = inlined_call_operand.vmem [shape: f32[1,16], index: 1, kind: input, shape index: {}]
  %s2 = inlined_call_operand.vmem [shape: bf16[96,96], index: 2, kind: input, shape index: {}]
  %s3 = inlined_call_operand.vmem [shape: bf16[32,32], index: 3, kind: input, shape index: {}]
  %s4 = inlined_call_operand.vmem [shape: f32[1,128], index: 4, kind: input, shape index: {}]
  %s5 = inlined_call_operand.hbm [shape: f32[16,32], index: 5, kind: output, shape index: {0}]
  %s6 = inlined_call_operand.hbm [shape: f32[2,32], index: 6, kind: output, shape index: {1}]
  %7 = xla_tuple %s5, %s6
  %s8 = sld [smem:[#allocation0]]
  $region38: #{multi_headed_attention.1} parent=0
    _
  %s10 = ssub.s32 1, %s8
  %s11 = scalar_select 0, %s10, %s8
  $region1: #{multi_headed_attention.1} parent=0
    #allocation2 [shape = 'u8[8192]{0}', space=vmem, size = 0x2000, scoped, tag = 'output window, operand 0, single buffered']
    #allocation3 [shape = 's32[1]{0}', space=sflag, size = 0x4, scoped, tag = 'scoped memory for multi_headed_attention.1']
    #allocation4 [shape = 'u8[1024]{0}', space=vmem, size = 0x400, scoped, tag = 'output window, operand 1, single buffered']
    #allocation5 [shape = 's32[1]{0}', space=sflag, size = 0x4, scoped, tag = 'scoped memory for multi_headed_attention.1']
    %12 = vsyncpa [#allocation3], 0
    %13 = vsyncpa [#allocation5], 0
    // Predicated region
    $region2: #{multi_headed_attention.1} parent=1 // pred_check
      _
    $region3: #{multi_headed_attention.1} parent=1 // pred_check_branch
      %15 = sbr.rel (0) target = $region5
    $region4: #{multi_headed_attention.1} parent=1 // pred_region
      _
    $region5: #{multi_headed_attention.1} parent=1 // pred_fallthru
      _
    // Predicated region
    $region6: #{multi_headed_attention.1} parent=1 // pred_check
      _
    $region7: #{multi_headed_attention.1} parent=1 // pred_check_branch
      %17 = sbr.rel (0) target = $region9
    $region8: #{multi_headed_attention.1} parent=1 // pred_region
      _
    $region9: #{multi_headed_attention.1} parent=1 // pred_fallthru
      _
    // Predicated region
    $region10: #{multi_headed_attention.1} parent=1 // pred_check
      _
    $region11: #{multi_headed_attention.1} parent=1 // pred_check_branch
      %19 = sbr.rel (0) target = $region13
    $region12: #{multi_headed_attention.1} parent=1 // pred_region
      _
    $region13: #{multi_headed_attention.1} parent=1 // pred_fallthru
      _
    // Predicated region
    $region14: #{multi_headed_attention.1} parent=1 // pred_check
      _
    $region15: #{multi_headed_attention.1} parent=1 // pred_check_branch
      %21 = sbr.rel (0) target = $region17
    $region16: #{multi_headed_attention.1} parent=1 // pred_region
      _
    $region17: #{multi_headed_attention.1} parent=1 // pred_fallthru
      _
    // Predicated region
    $region18: #{multi_headed_attention.1} parent=1 // pred_check
      _
    $region19: #{multi_headed_attention.1} parent=1 // pred_check_branch
      %23 = sbr.rel (0) target = $region21
    $region20: #{multi_headed_attention.1} parent=1 // pred_region
      _
    $region21: #{multi_headed_attention.1} parent=1 // pred_fallthru
      _
    %v25 = vld [vmem:[%s4] sm:$0x1]
    %v26 = vld [vmem:[%s0] sm:$0xff]
    %v27 = vld [vmem:[%s0 + $0x8] sm:$0xff]
    %v28 = vpack.c.bf16 %v27, %v26
    %v29 = vld [vmem:[%s2] sm:$0xf]
    %v30 = vld [vmem:[%s2 + $0x4] sm:$0xf]
    %v31 = vld [vmem:[%s2 + $0x8] sm:$0xf]
    %v32 = vld [vmem:[%s2 + $0xc] sm:$0xf]
    %v33 = vld [vmem:[%s2 + $0x10] sm:$0xf]
    %v34 = vld [vmem:[%s2 + $0x14] sm:$0xf]
    %v35 = vld [vmem:[%s2 + $0x18] sm:$0xf]
    %v36 = vld [vmem:[%s2 + $0x1c] sm:$0xf]
    %v37 = vld [vmem:[%s2 + $0x20] sm:$0xf]
    %v38 = vld [vmem:[%s2 + $0x24] sm:$0xf]
    %v39 = vld [vmem:[%s2 + $0x28] sm:$0xf]
    %v40 = vld [vmem:[%s2 + $0x2c] sm:$0xf]
    %v42 = vlaneseq
    %v43 = vshrl.u32 %v42, 7
    %v44 = vsub.s32 0, %v43
    %v45 = vrot.slane %v25, %v44
    %v59 = vunpack.c.l.b16 %v29
    %v60 = vunpack.c.l.b16 %v30
    %v61 = vunpack.c.l.b16 %v31
    %v62 = vunpack.c.l.b16 %v32
    %v63 = vunpack.c.l.b16 %v33
    %v64 = vunpack.c.l.b16 %v34
    %v65 = vunpack.c.l.b16 %v35
    %v66 = vunpack.c.l.b16 %v36
    %v67 = vunpack.c.l.b16 %v37
    %v68 = vunpack.c.l.b16 %v38
    %v69 = vunpack.c.l.b16 %v39
    %v70 = vunpack.c.l.b16 %v40
    %v71 = vpack.c.b16 %v60, %v59
    %v72 = vpack.c.b16 %v62, %v61
    %v73 = vpack.c.b16 %v64, %v63
    %v74 = vpack.c.b16 %v66, %v65
    %v75 = vpack.c.b16 %v68, %v67
    %v76 = vpack.c.b16 %v70, %v69
    %vm83 = vcmask 785408
    %v85 = vsel %vm83, %v28, 0
    %87 = vmatprep.subr.bf16.mxu0 0
    %88 = vmatpush1.bf16.msra.mxu0 %v71
    %89 = vmatprep.subr.bf16.mxu0 0
    %90 = vmatpush1.bf16.msra.mxu0 %v72
    %91 = vmatprep.subr.bf16.mxu0 0
    %92 = vmatpush1.bf16.msra.mxu0 %v73
    %93 = vmatprep.subr.bf16.mxu0 0
    %94 = vmatpush1.bf16.msra.mxu0 %v74
    %95 = vmatprep.subr.bf16.mxu0 0
    %96 = vmatpush1.bf16.msra.mxu0 %v75
    %97 = vmatprep.subr.bf16.mxu0 0
    %98 = vmatpush1.bf16.msra.mxu0 %v76
    %99 = vmatprep.subr.bf16.mxu0 0
    %100 = vmatpush1.bf16.msra.mxu0 0
    %101 = vmatprep.subr.bf16.mxu0 0
    %102 = vmatpush1.bf16.msra.mxu0 0
    %103 = vmatprep.subr.bf16.mxu0 0
    %104 = vmatpush1.bf16.msra.mxu0 0
    %105 = vmatprep.subr.bf16.mxu0 0
    %106 = vmatpush1.bf16.msra.mxu0 0
    %107 = vmatprep.subr.bf16.mxu0 0
    %108 = vmatpush1.bf16.msra.mxu0 0
    %109 = vmatprep.subr.bf16.mxu0 0
    %110 = vmatpush1.bf16.msra.mxu0 0
    %111 = vmatprep.subr.bf16.mxu0 0
    %112 = vmatpush1.bf16.msra.mxu0 0
    %113 = vmatprep.subr.bf16.mxu0 0
    %114 = vmatpush1.bf16.msra.mxu0 0
    %115 = vmatprep.subr.bf16.mxu0 0
    %116 = vmatpush1.bf16.msra.mxu0 0
    %117 = vmatprep.subr.bf16.mxu0 0
    %118 = vmatpush1.bf16.msra.mxu0 0
    %119 = vmatprep.mubr.bf16.mxu0 0
    %120 = vmatmul.mubr.bf16.gmra.mrb[0].mxu0 %v85
    %v121 = vpop.f32.mrb[0].mxu0
    %v122 = vadd.f32 %v45, %v121
    %v123 = vpop.f32.mrb[0].mxu0
    %v124 = vpop.f32.mrb[0].mxu0
    %v125 = vadd.f32 %v45, %v124
    %v126 = vpop.f32.mrb[0].mxu0
    %127 = vdwg.mxu0
    %v128 = vlaneseq
    %v129 = vshrl.u32 %v128, 7
    %v130 = vadd.s32 %v129, 8
    %v131 = vadd.s32 %v129, 16
    %v132 = vadd.s32 %v129, 24
    %v133 = vadd.s32 %v129, 32
    %v134 = vadd.s32 %v129, 40
    %v135 = vadd.s32 %v129, 48
    %v136 = vadd.s32 %v129, 56
    %v137 = vlaneseq
    %v138 = vand.u32 %v137, 127
    %v139 = vshra.s32 %v129, 4
    %v140 = vshra.s32 %v130, 4
    %v141 = vshra.s32 %v131, 4
    %v142 = vshra.s32 %v132, 4
    %v143 = vshra.s32 %v133, 4
    %v144 = vshra.s32 %v134, 4
    %v145 = vshra.s32 %v135, 4
    %v146 = vshra.s32 %v136, 4
    %v147 = vshra.s32 %v138, 3
    %vm148 = vcmp.eq.s32.totalorder %v139, %v147
    %vm149 = vcmp.eq.s32.totalorder %v140, %v147
    %vm150 = vcmp.eq.s32.totalorder %v141, %v147
    %vm151 = vcmp.eq.s32.totalorder %v142, %v147
    %vm152 = vcmp.eq.s32.totalorder %v143, %v147
    %vm153 = vcmp.eq.s32.totalorder %v144, %v147
    %vm154 = vcmp.eq.s32.totalorder %v145, %v147
    %vm155 = vcmp.eq.s32.totalorder %v146, %v147
    %v156 = vsel %vm148, 1, 0
    %v157 = vsel %vm149, 1, 0
    %v158 = vsel %vm150, 1, 0
    %v159 = vsel %vm151, 1, 0
    %v160 = vsel %vm152, 1, 0
    %v161 = vsel %vm153, 1, 0
    %v162 = vsel %vm154, 1, 0
    %v163 = vsel %vm155, 1, 0
    %v164 = vcvt.s32.f32 %v156
    %v165 = vcvt.s32.f32 %v157
    %v166 = vcvt.s32.f32 %v158
    %v167 = vcvt.s32.f32 %v159
    %v168 = vcvt.s32.f32 %v160
    %v169 = vcvt.s32.f32 %v161
    %v170 = vcvt.s32.f32 %v162
    %v171 = vcvt.s32.f32 %v163
    %180 = vrot.lane.b32.xlu0 %v164, 32
    %v181 = vpop.permute.xlu0 %180
    %182 = vrot.lane.b32.xlu0 %v165, 32
    %v183 = vpop.permute.xlu0 %182
    %184 = vrot.lane.b32.xlu0 %v166, 32
    %v185 = vpop.permute.xlu0 %184
    %186 = vrot.lane.b32.xlu0 %v167, 32
    %v187 = vpop.permute.xlu0 %186
    %188 = vrot.lane.b32.xlu0 %v168, 32
    %v189 = vpop.permute.xlu0 %188
    %190 = vrot.lane.b32.xlu0 %v169, 32
    %v191 = vpop.permute.xlu0 %190
    %192 = vrot.lane.b32.xlu0 %v170, 32
    %v193 = vpop.permute.xlu0 %192
    %194 = vrot.lane.b32.xlu0 %v171, 32
    %v195 = vpop.permute.xlu0 %194
    %v204 = vmul.f32 %v122, %v181
    %v205 = vmul.f32 %v125, %v183
    %v206 = vmul.f32 %v122, %v185
    %v207 = vmul.f32 %v125, %v187
    %v208 = vmul.f32 %v122, %v189
    %v209 = vmul.f32 %v125, %v191
    %v210 = vmul.f32 %v122, %v193
    %v211 = vmul.f32 %v125, %v195
    %212 = vrot.lane.b32.xlu0 %v164, 64
    %v213 = vpop.permute.xlu0 %212
    %214 = vrot.lane.b32.xlu0 %v165, 64
    %v215 = vpop.permute.xlu0 %214
    %216 = vrot.lane.b32.xlu0 %v166, 64
    %v217 = vpop.permute.xlu0 %216
    %218 = vrot.lane.b32.xlu0 %v167, 64
    %v219 = vpop.permute.xlu0 %218
    %220 = vrot.lane.b32.xlu0 %v168, 64
    %v221 = vpop.permute.xlu0 %220
    %222 = vrot.lane.b32.xlu0 %v169, 64
    %v223 = vpop.permute.xlu0 %222
    %224 = vrot.lane.b32.xlu0 %v170, 64
    %v225 = vpop.permute.xlu0 %224
    %226 = vrot.lane.b32.xlu0 %v171, 64
    %v227 = vpop.permute.xlu0 %226
    %v236 = vmul.f32 %v122, %v213
    %v237 = vmul.f32 %v125, %v215
    %v238 = vmul.f32 %v122, %v217
    %v239 = vmul.f32 %v125, %v219
    %v240 = vmul.f32 %v122, %v221
    %v241 = vmul.f32 %v125, %v223
    %v242 = vmul.f32 %v122, %v225
    %v243 = vmul.f32 %v125, %v227
    %v244 = vpack.c.bf16 %v125, %v122
    %v245 = vpack.c.bf16 %v205, %v204
    %v246 = vpack.c.bf16 %v207, %v206
    %v247 = vpack.c.bf16 %v209, %v208
    %v248 = vpack.c.bf16 %v211, %v210
    %v249 = vshra.s32 %v129, 3
    %v250 = vshra.s32 %v130, 3
    %v251 = vand.u32 %v138, 15
    %v252 = vshra.s32 %v251, 3
    %v253 = vld [vmem:[%s1] sm:$0x1]
    %v255 = vlaneseq
    %v256 = vshrl.u32 %v255, 7
    %v257 = vsub.s32 0, %v256
    %v258 = vrot.slane %v253, %v257
    %259 = vrot.lane.b32.xlu0 %v258, 16
    %v260 = vpop.permute.xlu0 %259
    %262 = vrot.lane.b32.xlu0 %v258, 32
    %v263 = vpop.permute.xlu0 %262
    %265 = vrot.lane.b32.xlu0 %v258, 48
    %v266 = vpop.permute.xlu0 %265
    %vm268 = vcmask 130048
    %v269 = vsel %vm268, %v253, %v260
    %vm270 = vcmask 261120
    %v271 = vsel %vm270, %v269, %v263
    %vm272 = vcmask 392192
    %v273 = vsel %vm272, %v271, %v266
    %vm274 = vcmp.eq.s32.totalorder %v249, %v252
    %vm275 = vcmp.eq.s32.totalorder %v250, %v252
    %v276 = vsel %vm274, 1, 0
    %v277 = vsel %vm275, 1, 0
    %v278 = vcvt.s32.f32 %v276
    %v279 = vcvt.s32.f32 %v277
    %v280 = vlaneseq
    %v281 = vshrl.u32 %v280, 7
    %v282 = vsub.s32 0, %v281
    %v283 = vrot.slane %v273, %v282
    %v284 = vmul.f32 %v278, %v283
    %v285 = vmul.f32 %v279, %v283
    %v286 = vsub.f32 %v284, 1.0
    %v287 = vsub.f32 %v285, 1.0
    %v288 = vmul.f32 %v286, 10000.0
    %v289 = vmul.f32 %v287, 10000.0
    %294 = vrot.lane.b32.xlu0 %v245, 96
    %v295 = vpop.permute.xlu0 %294
    %296 = vrot.lane.b32.xlu0 %v246, 96
    %v297 = vpop.permute.xlu0 %296
    %298 = vrot.lane.b32.xlu0 %v247, 96
    %v299 = vpop.permute.xlu0 %298
    %300 = vrot.lane.b32.xlu0 %v248, 96
    %v301 = vpop.permute.xlu0 %300
    %v303 = vsel %vm270, %v244, 0
    %v306 = vsel %vm270, %v295, 0
    %v309 = vsel %vm270, %v297, 0
    %v312 = vsel %vm270, %v299, 0
    %v315 = vsel %vm270, %v301, 0
    %317 = vmatprep.subr.bf16.mxu0 0
    %318 = vmatpush1.bf16.xpose.msra.mxu0 %v306
    %319 = vmatprep.subr.bf16.mxu0 0
    %320 = vmatpush1.bf16.xpose.msra.mxu0 %v309
    %321 = vmatprep.subr.bf16.mxu0 0
    %322 = vmatpush1.bf16.xpose.msra.mxu0 %v312
    %323 = vmatprep.subr.bf16.mxu0 0
    %324 = vmatpush1.bf16.xpose.msra.mxu0 %v315
    %325 = vmatprep.subr.bf16.mxu0 0
    %326 = vmatpush1.bf16.xpose.msra.mxu0 0
    %327 = vmatprep.subr.bf16.mxu0 0
    %328 = vmatpush1.bf16.xpose.msra.mxu0 0
    %329 = vmatprep.subr.bf16.mxu0 0
    %330 = vmatpush1.bf16.xpose.msra.mxu0 0
    %331 = vmatprep.subr.bf16.mxu0 0
    %332 = vmatpush1.bf16.xpose.msra.mxu0 0
    %333 = vmatprep.subr.bf16.mxu0 0
    %334 = vmatpush1.bf16.xpose.msra.mxu0 0
    %335 = vmatprep.subr.bf16.mxu0 0
    %336 = vmatpush1.bf16.xpose.msra.mxu0 0
    %337 = vmatprep.subr.bf16.mxu0 0
    %338 = vmatpush1.bf16.xpose.msra.mxu0 0
    %339 = vmatprep.subr.bf16.mxu0 0
    %340 = vmatpush1.bf16.xpose.msra.mxu0 0
    %341 = vmatprep.subr.bf16.mxu0 0
    %342 = vmatpush1.bf16.xpose.msra.mxu0 0
    %343 = vmatprep.subr.bf16.mxu0 0
    %344 = vmatpush1.bf16.xpose.msra.mxu0 0
    %345 = vmatprep.subr.bf16.mxu0 0
    %346 = vmatpush1.bf16.xpose.msra.mxu0 0
    %347 = vmatprep.subr.bf16.mxu0 0
    %348 = vmatpush1.bf16.xpose.msra.mxu0 0
    %349 = vmatprep.mubr.bf16.mxu0 0
    %350 = vmatmul.mubr.bf16.gmra.mrb[0].mxu0 %v303
    %v351 = vpop.f32.mrb[0].mxu0
    %v352 = vadd.f32 %v288, %v351
    %v353 = vpop.f32.mrb[0].mxu0
    %v354 = vpop.f32.mrb[0].mxu0
    %v355 = vadd.f32 %v289, %v354
    %v356 = vpop.f32.mrb[0].mxu0
    %357 = vdwg.mxu0
    %vm358 = vcmask 523264
    %v359 = vsel %vm358, %v352, -inf
    %360 = vmax.xlane.f32.xlu0 %v359
    %v361 = vpop.xlane.xlu0 %360
    %v362 = vsel %vm358, %v355, -inf
    %363 = vmax.xlane.f32.xlu0 %v362
    %v364 = vpop.xlane.xlu0 %363
    %v365 = vsub.f32 %v352, %v361
    %v366 = vsub.f32 %v355, %v364
    %v367 = vmul.f32 %v365, 1.442695
    %v368 = vpow.pop %v367
    %v369 = vmul.f32 %v366, 1.442695
    %v370 = vpow.pop %v369
    %379 = vrot.lane.b32.xlu0 %v236, 64
    %v380 = vpop.permute.xlu0 %379
    %381 = vrot.lane.b32.xlu0 %v237, 64
    %v382 = vpop.permute.xlu0 %381
    %383 = vrot.lane.b32.xlu0 %v238, 64
    %v384 = vpop.permute.xlu0 %383
    %385 = vrot.lane.b32.xlu0 %v239, 64
    %v386 = vpop.permute.xlu0 %385
    %387 = vrot.lane.b32.xlu0 %v240, 64
    %v388 = vpop.permute.xlu0 %387
    %389 = vrot.lane.b32.xlu0 %v241, 64
    %v390 = vpop.permute.xlu0 %389
    %391 = vrot.lane.b32.xlu0 %v242, 64
    %v392 = vpop.permute.xlu0 %391
    %393 = vrot.lane.b32.xlu0 %v243, 64
    %v394 = vpop.permute.xlu0 %393
    %v403 = vsel %vm270, %v380, %v181
    %v404 = vsel %vm270, %v382, %v183
    %v405 = vsel %vm270, %v384, %v185
    %v406 = vsel %vm270, %v386, %v187
    %v407 = vsel %vm270, %v388, %v189
    %v408 = vsel %vm270, %v390, %v191
    %v409 = vsel %vm270, %v392, %v193
    %v410 = vsel %vm270, %v394, %v195
    %v411 = vpack.c.bf16 %v404, %v403
    %v412 = vpack.c.bf16 %v406, %v405
    %v413 = vpack.c.bf16 %v408, %v407
    %v414 = vpack.c.bf16 %v410, %v409
    %v415 = vpack.c.bf16 %v370, %v368
    %v417 = vsel %vm358, %v415, 0
    %419 = vmatprep.subr.bf16.mxu0 0
    %420 = vmatpush1.bf16.msra.mxu0 %v411
    %421 = vmatprep.subr.bf16.mxu0 0
    %422 = vmatpush1.bf16.msra.mxu0 %v412
    %423 = vmatprep.subr.bf16.mxu0 0
    %424 = vmatpush1.bf16.msra.mxu0 %v413
    %425 = vmatprep.subr.bf16.mxu0 0
    %426 = vmatpush1.bf16.msra.mxu0 %v414
    %427 = vmatprep.subr.bf16.mxu0 0
    %428 = vmatpush1.bf16.msra.mxu0 0
    %429 = vmatprep.subr.bf16.mxu0 0
    %430 = vmatpush1.bf16.msra.mxu0 0
    %431 = vmatprep.subr.bf16.mxu0 0
    %432 = vmatpush1.bf16.msra.mxu0 0
    %433 = vmatprep.subr.bf16.mxu0 0
    %434 = vmatpush1.bf16.msra.mxu0 0
    %435 = vmatprep.subr.bf16.mxu0 0
    %436 = vmatpush1.bf16.msra.mxu0 0
    %437 = vmatprep.subr.bf16.mxu0 0
    %438 = vmatpush1.bf16.msra.mxu0 0
    %439 = vmatprep.subr.bf16.mxu0 0
    %440 = vmatpush1.bf16.msra.mxu0 0
    %441 = vmatprep.subr.bf16.mxu0 0
    %442 = vmatpush1.bf16.msra.mxu0 0
    %443 = vmatprep.subr.bf16.mxu0 0
    %444 = vmatpush1.bf16.msra.mxu0 0
    %445 = vmatprep.subr.bf16.mxu0 0
    %446 = vmatpush1.bf16.msra.mxu0 0
    %447 = vmatprep.subr.bf16.mxu0 0
    %448 = vmatpush1.bf16.msra.mxu0 0
    %449 = vmatprep.subr.bf16.mxu0 0
    %450 = vmatpush1.bf16.msra.mxu0 0
    %451 = vmatprep.mubr.bf16.mxu0 0
    %452 = vmatmul.mubr.bf16.gmra.mrb[0].mxu0 %v417
    %v453 = vpop.f32.mrb[0].mxu0
    %v454 = vadd.f32 0.0, %v453
    %v455 = vpop.f32.mrb[0].mxu0
    %v456 = vpop.f32.mrb[0].mxu0
    %v457 = vadd.f32 0.0, %v456
    %v458 = vpop.f32.mrb[0].mxu0
    %459 = vdwg.mxu0
    %v460 = vrcp.pop %v454
    %v461 = vrcp.pop %v457
    %464 = vrot.lane.b32.xlu0 %v460, 96
    %v465 = vpop.permute.xlu0 %464
    %466 = vrot.lane.b32.xlu0 %v461, 96
    %v467 = vpop.permute.xlu0 %466
    %v470 = vmul.f32 %v454, %v465
    %v471 = vmul.f32 %v457, %v467
    %v472 = vpack.c.bf16 %v471, %v470
    %v473 = vld [vmem:[%s3] sm:$0xf]
    %v474 = vld [vmem:[%s3 + $0x4] sm:$0xf]
    %v475 = vld [vmem:[%s3 + $0x8] sm:$0xf]
    %v476 = vld [vmem:[%s3 + $0xc] sm:$0xf]
    %v481 = vunpack.c.l.b16 %v473
    %v482 = vunpack.c.l.b16 %v474
    %v483 = vunpack.c.l.b16 %v475
    %v484 = vunpack.c.l.b16 %v476
    %v485 = vpack.c.b16 %v482, %v481
    %v486 = vpack.c.b16 %v484, %v483
    %489 = vrot.lane.b32.xlu0 %v45, 32
    %v490 = vpop.permute.xlu0 %489
    %v493 = vsel %vm270, %v472, 0
    %495 = vmatprep.subr.bf16.mxu0 0
    %496 = vmatpush1.bf16.msra.mxu0 %v485
    %497 = vmatprep.subr.bf16.mxu0 0
    %498 = vmatpush1.bf16.msra.mxu0 %v486
    %499 = vmatprep.subr.bf16.mxu0 0
    %500 = vmatpush1.bf16.msra.mxu0 0
    %501 = vmatprep.subr.bf16.mxu0 0
    %502 = vmatpush1.bf16.msra.mxu0 0
    %503 = vmatprep.subr.bf16.mxu0 0
    %504 = vmatpush1.bf16.msra.mxu0 0
    %505 = vmatprep.subr.bf16.mxu0 0
    %506 = vmatpush1.bf16.msra.mxu0 0
    %507 = vmatprep.subr.bf16.mxu0 0
    %508 = vmatpush1.bf16.msra.mxu0 0
    %509 = vmatprep.subr.bf16.mxu0 0
    %510 = vmatpush1.bf16.msra.mxu0 0
    %511 = vmatprep.subr.bf16.mxu0 0
    %512 = vmatpush1.bf16.msra.mxu0 0
    %513 = vmatprep.subr.bf16.mxu0 0
    %514 = vmatpush1.bf16.msra.mxu0 0
    %515 = vmatprep.subr.bf16.mxu0 0
    %516 = vmatpush1.bf16.msra.mxu0 0
    %517 = vmatprep.subr.bf16.mxu0 0
    %518 = vmatpush1.bf16.msra.mxu0 0
    %519 = vmatprep.subr.bf16.mxu0 0
    %520 = vmatpush1.bf16.msra.mxu0 0
    %521 = vmatprep.subr.bf16.mxu0 0
    %522 = vmatpush1.bf16.msra.mxu0 0
    %523 = vmatprep.subr.bf16.mxu0 0
    %524 = vmatpush1.bf16.msra.mxu0 0
    %525 = vmatprep.subr.bf16.mxu0 0
    %526 = vmatpush1.bf16.msra.mxu0 0
    %527 = vmatprep.mubr.bf16.mxu0 0
    %528 = vmatmul.mubr.bf16.gmra.mrb[0].mxu0 %v493
    %v529 = vpop.f32.mrb[0].mxu0
    %v530 = vadd.f32 %v490, %v529
    %v531 = vpop.f32.mrb[0].mxu0
    %v532 = vpop.f32.mrb[0].mxu0
    %v533 = vadd.f32 %v490, %v532
    %v534 = vpop.f32.mrb[0].mxu0
    %535 = vdwg.mxu0
    %536 = vst.msk [vmem:[#allocation2] sm:$0xff] %vm270, %v530
    %537 = vst.msk [vmem:[#allocation2 + $0x8] sm:$0xff] %vm270, %v533
    %v538 = vsel %vm270, %v530, 0.0
    %v539 = vrot.slane %v538, 4
    %v540 = vadd.f32 %v538, %v539
    %v541 = vrot.slane %v540, 2
    %v542 = vadd.f32 %v540, %v541
    %v543 = vrot.slane %v542, 1
    %v544 = vadd.f32 %v542, %v543
    %v545 = vsel %vm270, %v533, 0.0
    %v546 = vrot.slane %v545, 4
    %v547 = vadd.f32 %v545, %v546
    %v548 = vrot.slane %v547, 2
    %v549 = vadd.f32 %v547, %v548
    %v550 = vrot.slane %v549, 1
    %v551 = vadd.f32 %v549, %v550
    %vm552 = vcmask 1040384
    %v553 = vsel %vm552, %v544, %v551
    %v554 = vmul.f32 %v553, 0.125
    %vm555 = vcmask 254976
    %v556 = vsel %vm555, %v554, -inf
    %557 = vmax.xlane.f32.xlu0 %v556
    %v558 = vpop.xlane.xlu0 %557
    %v559 = vsub.f32 %v554, %v558
    %v560 = vmul.f32 %v559, 1.442695
    %v561 = vpow.pop %v560
    %v562 = vsel %vm555, %v561, 0.0
    %563 = vadd.xlane.f32.xlu0 %v562
    %v564 = vpop.xlane.xlu0 %563
    %v565 = vrcp.pop %v564
    %v566 = vmul.f32 %v561, %v565
    %567 = vst.msk [vmem:[#allocation4] sm:$0x3] %vm555, %v566
    // Predicated region
    $region22: #{multi_headed_attention.1} parent=1 // pred_check
      _
    $region23: #{multi_headed_attention.1} parent=1 // pred_check_branch
      %569 = sbr.rel (0) target = $region25
    $region24: #{multi_headed_attention.1} parent=1 // pred_region
      %s571 = ssub.s32 256, 256
      %572 = vsyncadd [#allocation3], %s571
      %s573 = sshll.u32 [#allocation2], 4
      %s574 = int_to_ptr.vmem [resolvable:$true] %s573
      %579 = dma.vmem_to_hbm [thread:$0]  %s574, 256, %s5, [#allocation3], 128, 128, 8
    $region25: #{multi_headed_attention.1} parent=1 // pred_fallthru
      _
    // Predicated region
    $region26: #{multi_headed_attention.1} parent=1 // pred_check
      _
    $region27: #{multi_headed_attention.1} parent=1 // pred_check_branch
      %581 = sbr.rel (0) target = $region29
    $region28: #{multi_headed_attention.1} parent=1 // pred_region
      %s583 = ssub.s32 32, 32
      %584 = vsyncadd [#allocation5], %s583
      %s586 = sshll.u32 [#allocation4], 4
      %s587 = int_to_ptr.vmem [resolvable:$true] %s586
      %589 = dma.vmem_to_hbm [thread:$0]  %s587, 32, %s6, [#allocation5]
    $region29: #{multi_headed_attention.1} parent=1 // pred_fallthru
      _
    // Predicated region
    $region30: #{multi_headed_attention.1} parent=1 // pred_check
      _
    $region31: #{multi_headed_attention.1} parent=1 // pred_check_branch
      %591 = sbr.rel (0) target = $region33
    $region32: #{multi_headed_attention.1} parent=1 // pred_region
      %592 = dma.done [#allocation3], 256
    $region33: #{multi_headed_attention.1} parent=1 // pred_fallthru
      _
    // Predicated region
    $region34: #{multi_headed_attention.1} parent=1 // pred_check
      _
    $region35: #{multi_headed_attention.1} parent=1 // pred_check_branch
      %594 = sbr.rel (0) target = $region37
    $region36: #{multi_headed_attention.1} parent=1 // pred_region
      %595 = dma.done [#allocation5], 32
    $region37: #{multi_headed_attention.1} parent=1 // pred_fallthru
      _
    %596 = vsyncpa [#allocation3], 1
    %597 = vsyncpa [#allocation5], 1

</llo_original>
